<compile_context>
chip_gen: v5e
topology: v5e:2x2
jax: 0.10.0
libtpu: 0.0.40
codegen_flags: <defaults>
</compile_context>

<pallas_src>
import jax
import jax.numpy as jnp
from jax.experimental import pallas as pl
from jax.experimental.pallas import tpu as pltpu


def _reward_kernel(x_il_ref, x_act_ref, w_il_ref, w_act_ref, b_ref, o_ref):
    # x_il_ref, x_act_ref: (TB, B*F) VMEM, stored dtype -- one sample per sublane row.
    # w_il_ref,  w_act_ref: (1,  B*F) f32 VMEM -- resident weight rows (broadcast).
    # b_ref: (1,) f32 SMEM.   o_ref: (TB, 1) f32 VMEM.
    x_il = x_il_ref[...].astype(jnp.float32)      # in-kernel cast (free on VPU)
    x_act = x_act_ref[...].astype(jnp.float32)
    prod = x_il * w_il_ref[...] + x_act * w_act_ref[...]          # VPU
    # Per-sample reward = lane reduction of its row (XLU) + bias.
    o_ref[...] = jnp.sum(prod, axis=1, keepdims=True) + b_ref[0]


_TB_MAX = 2048    # 2 MiB/input/step (f32): double-buffered working set ~8 MiB,
                  # fits default scoped VMEM on v5e/v6e/v7x.  Raise to 4096 +
                  # vmem_limit_bytes on v6e/v7x if step overhead ever shows.
_MIN_STEPS = 8    # >= ~4 steps per TensorCore under the v7x megacore split.


def _pick_tb(n, dtype):
    # Rows (samples) per grid step.  Row granularity follows sublane packing
    # (8 for f32, 16 for bf16, 32 for int8) so vregs stay full; the cap keeps
    # enough grid steps in flight for DMA double-buffering / megacore split.
    gran = max(8, 32 // jnp.dtype(dtype).itemsize)
    if n <= gran:
        return n                      # single block == full array (layout-legal)
    tb = (n // _MIN_STEPS) // gran * gran
    return max(gran, min(_TB_MAX, tb))


def _reward_pallas(x_il, x_act, w_il, w_act, bias):
    # x_il, x_act: (N, B*F) stored dtype;  w_il, w_act: (1, B*F) f32;  bias: (1,) f32.
    n, bf = x_il.shape
    tb = _pick_tb(n, x_il.dtype)
    grid = (pl.cdiv(n, tb),)
    in_bytes = jnp.dtype(x_il.dtype).itemsize
    cost = pl.CostEstimate(
        flops=4 * n * bf,
        transcendentals=0,
        bytes_accessed=2 * n * bf * in_bytes + n * 4 + 2 * bf * 4 + 4,
    )
    out = pl.pallas_call(
        _reward_kernel,
        out_shape=jax.ShapeDtypeStruct((n, 1), jnp.float32),
        grid=grid,
        in_specs=[
            pl.BlockSpec((tb, bf), lambda i: (i, 0)),      # IL rows for this block
            pl.BlockSpec((tb, bf), lambda i: (i, 0)),      # action rows for this block
            pl.BlockSpec((1, bf), lambda i: (0, 0)),       # w_il  (resident)
            pl.BlockSpec((1, bf), lambda i: (0, 0)),       # w_act (resident)
            pl.BlockSpec(memory_space=pltpu.SMEM),         # bias scalar
        ],
        out_specs=pl.BlockSpec((tb, 1), lambda i: (i, 0)),
        compiler_params=pltpu.CompilerParams(
            dimension_semantics=("parallel",)),
        cost_estimate=cost,
    )(x_il, x_act, w_il, w_act, bias)
    return out                                             # (N, 1) f32


def prepare_reward_params(weight, bias, B, F):
    """Hoisted, one-time preprocessing of the static nn.Linear(512, 1) parameters.

    torch.flatten(cat((IL, action), dim=1)) orders elements per row b as
    [IL[b, :], action[b, :]], so weight.reshape(B, 2F)[:, :F] multiplies IL and
    [:, F:] multiplies action.
    """
    assert 2 * B * F == 512, "Linear(512, 1) requires B * 2F == 512"
    w2 = jnp.asarray(weight, jnp.float32).reshape(B, 2 * F)
    w_il = w2[:, :F].reshape(1, B * F)                     # (1, B*F)
    w_act = w2[:, F:].reshape(1, B * F)                    # (1, B*F)
    b = jnp.asarray(bias, jnp.float32).reshape(1)          # (1,)
    return w_il, w_act, b


@jax.jit
def reward_model_A_forward(IL, action, params):
    """Single transition, exact PyTorch semantics: IL, action (B, F) -> (1,)."""
    w_il, w_act, b = params
    B, F = IL.shape
    x_il = IL.reshape(1, B * F)            # free row-major reshape, keep stored dtype
    x_act = action.reshape(1, B * F)
    out = _reward_pallas(x_il, x_act, w_il, w_act, b)      # (1, 1)
    return out.reshape(1)


@jax.jit
def reward_model_A_forward_batched(IL_batch, action_batch, params):
    """Batched reward evaluation: IL_batch, action_batch (N, B, F) -> (N,)."""
    w_il, w_act, b = params
    N, B, F = IL_batch.shape
    x_il = IL_batch.reshape(N, B * F)      # free row-major reshape, keep stored dtype
    x_act = action_batch.reshape(N, B * F)
    return _reward_pallas(x_il, x_act, w_il, w_act, b).reshape(N)


if __name__ == "__main__":
    key = jax.random.PRNGKey(0)
    k_il, k_act, k_w, k_b, k_bil, k_bact, k_ril, k_ract = jax.random.split(key, 8)

    B, F = 2, 128                      # cat((2,128),(2,128)) -> (2,256) -> flatten 512
    IL = jax.random.normal(k_il, (B, F), dtype=jnp.float32)
    action = jax.random.normal(k_act, (B, F), dtype=jnp.float32)

    # nn.Linear(512, 1) parameters: weight (1, 512), bias (1,).
    bound = 1.0 / jnp.sqrt(512.0)
    weight = jax.random.uniform(k_w, (1, 512), minval=-bound, maxval=bound, dtype=jnp.float32)
    bias = jax.random.uniform(k_b, (1,), minval=-bound, maxval=bound, dtype=jnp.float32)

    # Static parameter prep done once (hoisted out of the per-call path).
    params = prepare_reward_params(weight, bias, B, F)

    # --- Single-transition forward (matches the PyTorch module exactly) ---
    out = reward_model_A_forward(IL, action, params)
    jax.block_until_ready(out)
    ref = jnp.concatenate([IL, action], axis=1).reshape(-1) @ weight[0] + bias[0]
    assert out.shape == (1,)
    assert jnp.allclose(out[0], ref, rtol=1e-5, atol=1e-5), (out, ref)

    # --- Batched, ragged N (not a multiple of the block): exercises cdiv grid + masking ---
    N = 1000
    IL_b = jax.random.normal(k_bil, (N, B, F), dtype=jnp.float32)
    act_b = jax.random.normal(k_bact, (N, B, F), dtype=jnp.float32)
    out_b = reward_model_A_forward_batched(IL_b, act_b, params)
    jax.block_until_ready(out_b)
    ref_b = jnp.concatenate([IL_b, act_b], axis=2).reshape(N, -1) @ weight[0] + bias[0]
    assert out_b.shape == (N,)
    assert jnp.allclose(out_b, ref_b, rtol=1e-5, atol=1e-5)

    # --- bf16 activations: streamed as bf16, cast to f32 inside the kernel ---
    N2 = 256
    IL_h = jax.random.normal(k_ril, (N2, B, F), dtype=jnp.float32).astype(jnp.bfloat16)
    act_h = jax.random.normal(k_ract, (N2, B, F), dtype=jnp.float32).astype(jnp.bfloat16)
    out_h = reward_model_A_forward_batched(IL_h, act_h, params)
    jax.block_until_ready(out_h)
    ref_h = (jnp.concatenate([IL_h, act_h], axis=2).astype(jnp.float32).reshape(N2, -1)
             @ weight[0] + bias[0])
    assert out_h.shape == (N2,)
    assert jnp.allclose(out_h, ref_h, rtol=1e-4, atol=1e-4)

    print("KERNEL_OK")
</pallas_src>

<mosaic_0001>
module attributes {stable_mosaic.version = 11 : i64} {
  func.func @_reward_kernel(%arg0: i32, %arg1: memref<1x256xf32, #tpu.memory_space<vmem>>, %arg2: memref<1x256xf32, #tpu.memory_space<vmem>>, %arg3: memref<1x256xf32, #tpu.memory_space<vmem>>, %arg4: memref<1x256xf32, #tpu.memory_space<vmem>>, %arg5: memref<1xf32, #tpu.memory_space<smem>>, %arg6: memref<1x1xf32, #tpu.memory_space<vmem>>) attributes {dimension_semantics = [#tpu.dimension_semantics<parallel>], iteration_bounds = array<i64: 1>, scalar_prefetch = 0 : i64, scratch_operands = 0 : i64, tpu.core_type = #tpu.core_type<tc>, window_params = [{transform_indices = @transform_0, window_bounds = array<i64: 1, 256>}, {transform_indices = @transform_1, window_bounds = array<i64: 1, 256>}, {pipeline_mode = #tpu.pipeline_mode<synchronous>, transform_indices = @transform_2, window_bounds = array<i64: 1, 256>}, {pipeline_mode = #tpu.pipeline_mode<synchronous>, transform_indices = @transform_3, window_bounds = array<i64: 1, 256>}, {transform_indices = @transform_4, window_bounds = array<i64: 1>}, {transform_indices = @transform_5, window_bounds = array<i64: 1, 1>}]} {
    %c0 = arith.constant 0 : index
    %c0_0 = arith.constant 0 : index
    %0 = vector.load %arg1[%c0, %c0_0] : memref<1x256xf32, #tpu.memory_space<vmem>>, vector<1x256xf32>
    %c0_1 = arith.constant 0 : index
    %c0_2 = arith.constant 0 : index
    %1 = vector.load %arg2[%c0_1, %c0_2] : memref<1x256xf32, #tpu.memory_space<vmem>>, vector<1x256xf32>
    %c0_3 = arith.constant 0 : index
    %c0_4 = arith.constant 0 : index
    %2 = vector.load %arg3[%c0_3, %c0_4] : memref<1x256xf32, #tpu.memory_space<vmem>>, vector<1x256xf32>
    %3 = arith.mulf %0, %2 : vector<1x256xf32>
    %c0_5 = arith.constant 0 : index
    %c0_6 = arith.constant 0 : index
    %4 = vector.load %arg4[%c0_5, %c0_6] : memref<1x256xf32, #tpu.memory_space<vmem>>, vector<1x256xf32>
    %5 = arith.mulf %1, %4 : vector<1x256xf32>
    %6 = arith.addf %3, %5 : vector<1x256xf32>
    %cst = arith.constant dense<0.000000e+00> : vector<1xf32>
    %7 = vector.multi_reduction <add>, %6, %cst [1] : vector<1x256xf32> to vector<1xf32>
    %8 = vector.shape_cast %7 : vector<1xf32> to vector<1x1xf32>
    %c0_7 = arith.constant 0 : index
    %9 = memref.load %arg5[%c0_7] : memref<1xf32, #tpu.memory_space<smem>>
    %10 = vector.broadcast %9 : f32 to vector<1x1xf32>
    %11 = arith.addf %8, %10 : vector<1x1xf32>
    %c0_8 = arith.constant 0 : index
    %c0_9 = arith.constant 0 : index
    %12 = vector.load %arg6[%c0_8, %c0_9] : memref<1x1xf32, #tpu.memory_space<vmem>>, vector<1x1xf32>
    tpu.vector_store %arg6[%c0_8, %c0_9], %11 {strides = array<i32>} : memref<1x1xf32, #tpu.memory_space<vmem>>, vector<1x1xf32>,
    return
  }
  func.func @transform_0(%arg0: i32) -> (i32, i32) {
    %c0_i32 = arith.constant 0 : i32
    %c0_i32_0 = arith.constant 0 : i32
    return %arg0, %c0_i32 : i32, i32
  }
  func.func @transform_1(%arg0: i32) -> (i32, i32) {
    %c0_i32 = arith.constant 0 : i32
    %c0_i32_0 = arith.constant 0 : i32
    return %arg0, %c0_i32 : i32, i32
  }
  func.func @transform_2(%arg0: i32) -> (i32, i32) {
    %c0_i32 = arith.constant 0 : i32
    %c0_i32_0 = arith.constant 0 : i32
    %c0_i32_1 = arith.constant 0 : i32
    return %c0_i32, %c0_i32_0 : i32, i32
  }
  func.func @transform_3(%arg0: i32) -> (i32, i32) {
    %c0_i32 = arith.constant 0 : i32
    %c0_i32_0 = arith.constant 0 : i32
    %c0_i32_1 = arith.constant 0 : i32
    return %c0_i32, %c0_i32_0 : i32, i32
  }
  func.func @transform_4(%arg0: i32) -> i32 {
    %c0_i32 = arith.constant 0 : i32
    %c0_i32_0 = arith.constant 0 : i32
    return %c0_i32 : i32
  }
  func.func @transform_5(%arg0: i32) -> (i32, i32) {
    %c0_i32 = arith.constant 0 : i32
    %c0_i32_0 = arith.constant 0 : i32
    return %arg0, %c0_i32 : i32, i32
  }
}

</mosaic_0001>

<llo_original>
// kernel: reward_model_A_forward.1
$region0: #{reward_model_A_forward.1}
  #allocation0 [shape = 'u32[]', space=smem, size = 0x4, offset = 0x4, fixed_abs, tag = 'smem constant byte address 0x4 - core index']
  #allocation1 [shape = 'u32[72,128]{1,0:T(1,128)}', space=vmem, size = 0x9000, scoped, tag = 'internal scratch']
  #allocation2 [shape = 'f32[1]{0:T(128)S(6)}', space=smem, size = 0x200, scoped, tag = 'scoped memory for reward_model_A_forward.1']
  %s0 = inlined_call_operand.vmem [shape: f32[1,256], index: 0, kind: input, shape index: {}]
  %s1 = inlined_call_operand.vmem [shape: f32[1,256], index: 1, kind: input, shape index: {}]
  %s2 = inlined_call_operand.hbm [shape: f32[1,256], index: 2, kind: input, shape index: {}]
  %s3 = inlined_call_operand.vmem [shape: f32[1,256], index: 3, kind: input, shape index: {}]
  %s4 = inlined_call_operand.<no memory space> [shape: f32[1], index: 4, kind: input, shape index: {}]
  %s5 = inlined_call_operand.hbm [shape: f32[1,1], index: 5, kind: output, shape index: {}]
  %s6 = sld [smem:[#allocation0]]
  $region34: #{reward_model_A_forward.1} parent=0
    _
  %s8 = ssub.s32 1, %s6
  %s9 = scalar_select 0, %s8, %s6
  %10 = sst [smem:[#allocation2]] %s4
  $region1: #{reward_model_A_forward.1} parent=0
    #allocation3 [shape = 'u8[1024]{0}', space=vmem, size = 0x400, scoped, tag = 'input window, operand 2, single buffered']
    #allocation4 [shape = 's32[1]{0}', space=sflag, size = 0x4, scoped, tag = 'scoped memory for reward_model_A_forward.1']
    #allocation5 [shape = 's32[1]{0}', space=sflag, size = 0x4, scoped, tag = 'scoped memory for reward_model_A_forward.1']
    #allocation6 [shape = 'u8[512]{0}', space=vmem, size = 0x400, scoped, tag = 'output window, operand 0, single buffered']
    %11 = vsyncpa [#allocation4], 0
    %12 = vsyncpa [#allocation5], 0
    // Predicated region
    $region2: #{reward_model_A_forward.1} parent=1 // pred_check
      _
    $region3: #{reward_model_A_forward.1} parent=1 // pred_check_branch
      %14 = sbr.rel (0) target = $region5
    $region4: #{reward_model_A_forward.1} parent=1 // pred_region
      _
    $region5: #{reward_model_A_forward.1} parent=1 // pred_fallthru
      _
    // Predicated region
    $region6: #{reward_model_A_forward.1} parent=1 // pred_check
      _
    $region7: #{reward_model_A_forward.1} parent=1 // pred_check_branch
      %16 = sbr.rel (0) target = $region9
    $region8: #{reward_model_A_forward.1} parent=1 // pred_region
      _
    $region9: #{reward_model_A_forward.1} parent=1 // pred_fallthru
      _
    // Predicated region
    $region10: #{reward_model_A_forward.1} parent=1 // pred_check
      _
    $region11: #{reward_model_A_forward.1} parent=1 // pred_check_branch
      %18 = sbr.rel (0) target = $region13
    $region12: #{reward_model_A_forward.1} parent=1 // pred_region
      %20 = vsyncadd [#allocation4], 0
      %s22 = sshll.u32 %s2, 4
      %s23 = int_to_ptr.hbm [resolvable:$true] %s22
      %s24 = sshll.u32 [#allocation3], 4
      %s25 = int_to_ptr.vmem [resolvable:$true] %s24
      %27 = dma.hbm_to_vmem [thread:$0]  %s23, 32, %s25, [#allocation4]
    $region13: #{reward_model_A_forward.1} parent=1 // pred_fallthru
      _
    // Predicated region
    $region14: #{reward_model_A_forward.1} parent=1 // pred_check
      _
    $region15: #{reward_model_A_forward.1} parent=1 // pred_check_branch
      %29 = sbr.rel (0) target = $region17
    $region16: #{reward_model_A_forward.1} parent=1 // pred_region
      _
    $region17: #{reward_model_A_forward.1} parent=1 // pred_fallthru
      _
    // Predicated region
    $region18: #{reward_model_A_forward.1} parent=1 // pred_check
      _
    $region19: #{reward_model_A_forward.1} parent=1 // pred_check_branch
      %31 = sbr.rel (0) target = $region21
    $region20: #{reward_model_A_forward.1} parent=1 // pred_region
      _
    $region21: #{reward_model_A_forward.1} parent=1 // pred_fallthru
      _
    // Predicated region
    $region22: #{reward_model_A_forward.1} parent=1 // pred_check
      _
    $region23: #{reward_model_A_forward.1} parent=1 // pred_check_branch
      %33 = sbr.rel (0) target = $region25
    $region24: #{reward_model_A_forward.1} parent=1 // pred_region
      %35 = dma.done [#allocation4], 32
    $region25: #{reward_model_A_forward.1} parent=1 // pred_fallthru
      _
    %v36 = vld [vmem:[%s0] sm:$0x3]
    %v37 = vld [vmem:[%s1] sm:$0x3]
    %v38 = vld [vmem:[#allocation3] sm:$0x3]
    %v39 = vmul.f32 %v36, %v38
    %v40 = vld [vmem:[%s3] sm:$0x3]
    %v41 = vmul.f32 %v37, %v40
    %v42 = vadd.f32 %v39, %v41
    %v44 = vperm.slane %v42, 0
    %v45 = vperm.slane %v42, 1
    %vm48 = vcmask 1040384
    %v49 = vsel %vm48, %v44, 0.0
    %v50 = vsel %vm48, %v45, 0.0
    %v51 = vadd.f32 %v49, %v50
    %52 = vadd.xlane.f32.xlu0 %v51
    %v53 = vpop.xlane.xlu0 %52
    %s54 = sld [smem:[#allocation2]]
    %v55 = vstv %s54
    %v56 = vadd.f32 %v53, %v55
    %vm57 = vcmask 0
    %58 = vst.msk [vmem:[#allocation6] sm:$0x1] %vm57, %v56
    // Predicated region
    $region26: #{reward_model_A_forward.1} parent=1 // pred_check
      _
    $region27: #{reward_model_A_forward.1} parent=1 // pred_check_branch
      %60 = sbr.rel (0) target = $region29
    $region28: #{reward_model_A_forward.1} parent=1 // pred_region
      %62 = vsyncadd [#allocation5], 0
      %s64 = sshll.u32 [#allocation6], 4
      %s65 = int_to_ptr.vmem [resolvable:$true] %s64
      %s66 = sshll.u32 %s5, 4
      %s67 = int_to_ptr.hbm [resolvable:$true] %s66
      %69 = dma.vmem_to_hbm [thread:$0]  %s65, 16, %s67, [#allocation5]
    $region29: #{reward_model_A_forward.1} parent=1 // pred_fallthru
      _
    // Predicated region
    $region30: #{reward_model_A_forward.1} parent=1 // pred_check
      _
    $region31: #{reward_model_A_forward.1} parent=1 // pred_check_branch
      %71 = sbr.rel (0) target = $region33
    $region32: #{reward_model_A_forward.1} parent=1 // pred_region
      %73 = dma.done [#allocation5], 16
    $region33: #{reward_model_A_forward.1} parent=1 // pred_fallthru
      _
    %74 = vsyncpa [#allocation4], 1
    %75 = vsyncpa [#allocation5], 1

</llo_original>
